<compile_context>
chip_gen: v5e
topology: v5e:2x2
jax: 0.10.0
libtpu: 0.0.40
codegen_flags: <defaults>
</compile_context>

<pallas_src>
import math

import jax
import jax.numpy as jnp
from jax.experimental import pallas as pl
from jax.experimental.pallas import tpu as pltpu


def _round_up(x, m):
    return (x + m - 1) // m * m


# --------------------------------------------------------------------------
# Kernels
# --------------------------------------------------------------------------
def _ffn_kernel_single(x_ref, w1_ref, b1_ref, w2_ref, b2_ref, o_ref):
    # fc1: (tm, d_model) @ (d_model, d_ffn) in bf16 -> f32; bias + ReLU in f32.
    h = jnp.dot(x_ref[...], w1_ref[...], preferred_element_type=jnp.float32)
    h = jnp.maximum(h + b1_ref[...], 0.0)
    # fc2: (tm, d_ffn) @ (d_ffn, d_model) in bf16 -> f32; bias in f32.
    y = jnp.dot(h.astype(w2_ref.dtype), w2_ref[...],
                preferred_element_type=jnp.float32)
    o_ref[...] = (y + b2_ref[...]).astype(o_ref.dtype)


def _ffn_kernel_tiled(x_ref, w1_ref, b1_ref, w2_ref, b2_ref, o_ref, acc_ref):
    kf = pl.program_id(1)

    @pl.when(kf == 0)
    def _init():
        acc_ref[...] = jnp.zeros_like(acc_ref)

    # fc1 tile: (tm, d_model) @ (d_model, tf) bf16 -> f32; bias + ReLU in f32.
    h = jnp.dot(x_ref[...], w1_ref[...], preferred_element_type=jnp.float32)
    h = jnp.maximum(h + b1_ref[...], 0.0)

    # fc2 partial: (tm, tf) @ (tf, d_model), accumulated in f32 scratch.
    acc_ref[...] += jnp.dot(h.astype(w2_ref.dtype), w2_ref[...],
                            preferred_element_type=jnp.float32)

    @pl.when(kf == pl.num_programs(1) - 1)
    def _finalize():
        o_ref[...] = (acc_ref[...] + b2_ref[...]).astype(o_ref.dtype)


# --------------------------------------------------------------------------
# pallas_call builders
# --------------------------------------------------------------------------
def _build_single(n_pad, d_model, d_ffn, tm, out_dtype, vmem_limit_bytes):
    n_rows = n_pad // tm
    in_specs = [
        pl.BlockSpec((tm, d_model), lambda i: (i, 0)),        # x rows
        pl.BlockSpec((d_model, d_ffn), lambda i: (0, 0)),     # W1 (resident)
        pl.BlockSpec((1, d_ffn), lambda i: (0, 0)),           # b1
        pl.BlockSpec((d_ffn, d_model), lambda i: (0, 0)),     # W2 (resident)
        pl.BlockSpec((1, d_model), lambda i: (0, 0)),         # b2
    ]
    out_spec = pl.BlockSpec((tm, d_model), lambda i: (i, 0))
    return pl.pallas_call(
        _ffn_kernel_single,
        out_shape=jax.ShapeDtypeStruct((n_pad, d_model), out_dtype),
        grid_spec=pltpu.PrefetchScalarGridSpec(
            num_scalar_prefetch=0,
            grid=(n_rows,),
            in_specs=in_specs,
            out_specs=out_spec,
        ),
        compiler_params=pltpu.CompilerParams(
            dimension_semantics=("parallel",),
            vmem_limit_bytes=vmem_limit_bytes,
        ),
    )


def _build_tiled(n_pad, d_model, d_ffn, tm, tf, out_dtype, vmem_limit_bytes):
    n_rows = n_pad // tm
    n_kf = d_ffn // tf
    in_specs = [
        pl.BlockSpec((tm, d_model), lambda i, kf: (i, 0)),    # x rows
        pl.BlockSpec((d_model, tf), lambda i, kf: (0, kf)),   # W1 column tile
        pl.BlockSpec((1, tf), lambda i, kf: (0, kf)),         # b1 tile
        pl.BlockSpec((tf, d_model), lambda i, kf: (kf, 0)),   # W2 row tile
        pl.BlockSpec((1, d_model), lambda i, kf: (0, 0)),     # b2
    ]
    out_spec = pl.BlockSpec((tm, d_model), lambda i, kf: (i, 0))
    return pl.pallas_call(
        _ffn_kernel_tiled,
        out_shape=jax.ShapeDtypeStruct((n_pad, d_model), out_dtype),
        grid_spec=pltpu.PrefetchScalarGridSpec(
            num_scalar_prefetch=0,
            grid=(n_rows, n_kf),
            in_specs=in_specs,
            out_specs=out_spec,
            scratch_shapes=[pltpu.VMEM((tm, d_model), jnp.float32)],
        ),
        compiler_params=pltpu.CompilerParams(
            dimension_semantics=("parallel", "arbitrary"),
            vmem_limit_bytes=vmem_limit_bytes,
        ),
    )


# --------------------------------------------------------------------------
# Public wrapper
# --------------------------------------------------------------------------
def positionwise_ffn(x, w1, b1, w2, b2, *, tm=256, tf=None,
                     vmem_limit_bytes=48 * 1024 * 1024):
    """fc2(relu(fc1(x))) with eval-mode dropout (identity).

    x : (B, S, d_model)
    w1: (d_model, d_ffn), b1: (1, d_ffn)    -- fc1, pre-transposed
    w2: (d_ffn, d_model), b2: (1, d_model)  -- fc2, pre-transposed
    tm: row tile (multiple of 8; 256 matches the v6e/v7x MXU M-dim).
        Rows are zero-padded to a multiple of tm and the tail sliced off.
    tf: d_ffn tile. None -> single pass with weights resident in VMEM
        (best for v5e/v6e and moderate d_ffn on v7x). For very large d_ffn
        pass a multiple of 128 dividing d_ffn to bound VMEM.
    """
    B, S, d_model = x.shape
    d_ffn = w1.shape[1]
    N = B * S

    if tf is None:
        tf = d_ffn
    assert d_ffn % tf == 0, "d_ffn tile must divide d_ffn"
    if tf != d_ffn:
        assert tf % 128 == 0, "partial d_ffn tile must be lane-aligned (x128)"

    # Do not use a row tile larger than the (8-aligned) row count.
    tm = min(tm, _round_up(N, 8))
    n_pad = _round_up(N, tm)

    x2d = x.reshape(N, d_model)
    if n_pad != N:
        x2d = jnp.pad(x2d, ((0, n_pad - N), (0, 0)))

    # bf16 operands on the MXU, f32 accumulation inside the kernel.
    x2d = x2d.astype(jnp.bfloat16)
    w1 = w1.astype(jnp.bfloat16)
    w2 = w2.astype(jnp.bfloat16)
    b1 = b1.reshape(1, d_ffn).astype(jnp.float32)
    b2 = b2.reshape(1, d_model).astype(jnp.float32)

    if tf == d_ffn:
        call = _build_single(n_pad, d_model, d_ffn, tm, x.dtype,
                             vmem_limit_bytes)
    else:
        call = _build_tiled(n_pad, d_model, d_ffn, tm, tf, x.dtype,
                            vmem_limit_bytes)
    out2d = call(x2d, w1, b1, w2, b2)

    return out2d[:N].reshape(B, S, d_model)


def _xavier_uniform(key, fan_out, fan_in, dtype=jnp.float32):
    # matches nn.init.xavier_uniform_ on a (fan_out, fan_in) torch weight
    limit = math.sqrt(6.0 / (fan_in + fan_out))
    return jax.random.uniform(key, (fan_out, fan_in), dtype,
                              minval=-limit, maxval=limit)


if __name__ == "__main__":
    # Lane-dense dims (multiples of 128) but still small.
    d_model, d_ffn = 128, 256
    B, S = 2, 10            # N = 20 rows -> exercises the row-padding path

    key = jax.random.PRNGKey(0)
    kx, k1, k2 = jax.random.split(key, 3)

    # Torch-layout weights: fc1.weight (d_ffn, d_model), fc2.weight (d_model, d_ffn)
    w1_t = _xavier_uniform(k1, d_ffn, d_model)
    w2_t = _xavier_uniform(k2, d_model, d_ffn)
    b1 = jnp.zeros((1, d_ffn), jnp.float32)   # nn.init.constant_(bias, 0.0)
    b2 = jnp.zeros((1, d_model), jnp.float32)

    # Kernel layout: (in_dim, out_dim)
    w1 = w1_t.T
    w2 = w2_t.T

    x = jax.random.normal(kx, (B, S, d_model), jnp.float32)

    # Single-pass (resident-weight) path.
    out = positionwise_ffn(x, w1, b1, w2, b2)
    out = jax.block_until_ready(out)

    # K-tiled (accumulator) path.
    out_tiled = positionwise_ffn(x, w1, b1, w2, b2, tm=128, tf=128)
    out_tiled = jax.block_until_ready(out_tiled)

    # Reference in plain JAX using the same bf16-rounded operands (matmuls in
    # f32), tolerance loosened for bf16 inputs.
    xb = x.reshape(-1, d_model).astype(jnp.bfloat16).astype(jnp.float32)
    w1b = w1.astype(jnp.bfloat16).astype(jnp.float32)
    w2b = w2.astype(jnp.bfloat16).astype(jnp.float32)
    h = jnp.maximum(xb @ w1b + b1, 0.0)
    ref = (h.astype(jnp.bfloat16).astype(jnp.float32) @ w2b + b2)
    ref = ref.reshape(B, S, d_model)

    assert out.shape == (B, S, d_model)
    assert jnp.allclose(out, ref, atol=5e-2, rtol=5e-2), \
        float(jnp.max(jnp.abs(out - ref)))
    assert jnp.allclose(out_tiled, ref, atol=5e-2, rtol=5e-2), \
        float(jnp.max(jnp.abs(out_tiled - ref)))

    print("KERNEL_OK")
</pallas_src>

<mosaic_0001>
module attributes {stable_mosaic.version = 11 : i64} {
  func.func @_ffn_kernel_single(%arg0: i32, %arg1: memref<24x128xbf16, #tpu.memory_space<vmem>>, %arg2: memref<128x256xbf16, #tpu.memory_space<vmem>>, %arg3: memref<1x256xf32, #tpu.memory_space<vmem>>, %arg4: memref<256x128xbf16, #tpu.memory_space<vmem>>, %arg5: memref<1x128xf32, #tpu.memory_space<vmem>>, %arg6: memref<24x128xf32, #tpu.memory_space<vmem>>) attributes {dimension_semantics = [#tpu.dimension_semantics<parallel>], iteration_bounds = array<i64: 1>, scalar_prefetch = 0 : i64, scratch_operands = 0 : i64, tpu.core_type = #tpu.core_type<tc>, window_params = [{transform_indices = @transform_0, window_bounds = array<i64: 24, 128>}, {pipeline_mode = #tpu.pipeline_mode<synchronous>, transform_indices = @transform_1, window_bounds = array<i64: 128, 256>}, {pipeline_mode = #tpu.pipeline_mode<synchronous>, transform_indices = @transform_2, window_bounds = array<i64: 1, 256>}, {pipeline_mode = #tpu.pipeline_mode<synchronous>, transform_indices = @transform_3, window_bounds = array<i64: 256, 128>}, {pipeline_mode = #tpu.pipeline_mode<synchronous>, transform_indices = @transform_4, window_bounds = array<i64: 1, 128>}, {transform_indices = @transform_5, window_bounds = array<i64: 24, 128>}]} {
    %c0 = arith.constant 0 : index
    %c0_0 = arith.constant 0 : index
    %0 = vector.load %arg1[%c0, %c0_0] : memref<24x128xbf16, #tpu.memory_space<vmem>>, vector<24x128xbf16>
    %c0_1 = arith.constant 0 : index
    %c0_2 = arith.constant 0 : index
    %1 = vector.load %arg2[%c0_1, %c0_2] : memref<128x256xbf16, #tpu.memory_space<vmem>>, vector<128x256xbf16>
    %cst = arith.constant dense<0.000000e+00> : vector<24x256xf32>
    %2 = tpu.matmul %0, %1, %cst {dimension_numbers = #tpu.dot_dimension_numbers<[1], [0], [0], [1], [0, 0, 1, 1], [], []>} : vector<24x128xbf16>, vector<128x256xbf16>, vector<24x256xf32> -> vector<24x256xf32>
    %c0_3 = arith.constant 0 : index
    %c0_4 = arith.constant 0 : index
    %3 = vector.load %arg3[%c0_3, %c0_4] : memref<1x256xf32, #tpu.memory_space<vmem>>, vector<1x256xf32>
    %4 = vector.broadcast %3 : vector<1x256xf32> to vector<24x256xf32>
    %5 = arith.addf %2, %4 : vector<24x256xf32>
    %cst_5 = arith.constant 0.000000e+00 : f32
    %6 = vector.broadcast %cst_5 : f32 to vector<24x256xf32>
    %7 = arith.maximumf %5, %6 : vector<24x256xf32>
    %8 = arith.truncf %7 : vector<24x256xf32> to vector<24x256xbf16>
    %c0_6 = arith.constant 0 : index
    %c0_7 = arith.constant 0 : index
    %9 = vector.load %arg4[%c0_6, %c0_7] : memref<256x128xbf16, #tpu.memory_space<vmem>>, vector<256x128xbf16>
    %cst_8 = arith.constant dense<0.000000e+00> : vector<24x128xf32>
    %10 = tpu.matmul %8, %9, %cst_8 {dimension_numbers = #tpu.dot_dimension_numbers<[1], [0], [0], [1], [0, 0, 1, 1], [], []>} : vector<24x256xbf16>, vector<256x128xbf16>, vector<24x128xf32> -> vector<24x128xf32>
    %c0_9 = arith.constant 0 : index
    %c0_10 = arith.constant 0 : index
    %11 = vector.load %arg5[%c0_9, %c0_10] : memref<1x128xf32, #tpu.memory_space<vmem>>, vector<1x128xf32>
    %12 = vector.broadcast %11 : vector<1x128xf32> to vector<24x128xf32>
    %13 = arith.addf %10, %12 : vector<24x128xf32>
    %c0_11 = arith.constant 0 : index
    %c0_12 = arith.constant 0 : index
    %14 = vector.load %arg6[%c0_11, %c0_12] : memref<24x128xf32, #tpu.memory_space<vmem>>, vector<24x128xf32>
    tpu.vector_store %arg6[%c0_11, %c0_12], %13 {strides = array<i32>} : memref<24x128xf32, #tpu.memory_space<vmem>>, vector<24x128xf32>,
    return
  }
  func.func @transform_0(%arg0: i32) -> (i32, i32) {
    %c0_i32 = arith.constant 0 : i32
    %c0_i32_0 = arith.constant 0 : i32
    return %arg0, %c0_i32 : i32, i32
  }
  func.func @transform_1(%arg0: i32) -> (i32, i32) {
    %c0_i32 = arith.constant 0 : i32
    %c0_i32_0 = arith.constant 0 : i32
    %c0_i32_1 = arith.constant 0 : i32
    return %c0_i32, %c0_i32_0 : i32, i32
  }
  func.func @transform_2(%arg0: i32) -> (i32, i32) {
    %c0_i32 = arith.constant 0 : i32
    %c0_i32_0 = arith.constant 0 : i32
    %c0_i32_1 = arith.constant 0 : i32
    return %c0_i32, %c0_i32_0 : i32, i32
  }
  func.func @transform_3(%arg0: i32) -> (i32, i32) {
    %c0_i32 = arith.constant 0 : i32
    %c0_i32_0 = arith.constant 0 : i32
    %c0_i32_1 = arith.constant 0 : i32
    return %c0_i32, %c0_i32_0 : i32, i32
  }
  func.func @transform_4(%arg0: i32) -> (i32, i32) {
    %c0_i32 = arith.constant 0 : i32
    %c0_i32_0 = arith.constant 0 : i32
    %c0_i32_1 = arith.constant 0 : i32
    return %c0_i32, %c0_i32_0 : i32, i32
  }
  func.func @transform_5(%arg0: i32) -> (i32, i32) {
    %c0_i32 = arith.constant 0 : i32
    %c0_i32_0 = arith.constant 0 : i32
    return %arg0, %c0_i32 : i32, i32
  }
}

</mosaic_0001>

<llo_original>
// kernel: tpu_custom_call.1
$region0: #{tpu_custom_call.1}
  #allocation0 [shape = 'u32[]', space=smem, size = 0x4, offset = 0x4, fixed_abs, tag = 'smem constant byte address 0x4 - core index']
  #allocation1 [shape = 'u32[72,128]{1,0:T(1,128)}', space=vmem, size = 0x9000, scoped, tag = 'internal scratch']
  %s0 = inlined_call_operand.hbm [shape: bf16[24,128], index: 0, kind: input, shape index: {}]
  %s1 = inlined_call_operand.hbm [shape: bf16[128,256], index: 1, kind: input, shape index: {}]
  %s2 = inlined_call_operand.hbm [shape: f32[1,256], index: 2, kind: input, shape index: {}]
  %s3 = inlined_call_operand.hbm [shape: bf16[256,128], index: 3, kind: input, shape index: {}]
  %s4 = inlined_call_operand.vmem [shape: f32[1,128], index: 4, kind: input, shape index: {}]
  %s5 = inlined_call_operand.hbm [shape: f32[24,128], index: 5, kind: output, shape index: {}]
  %s6 = sld [smem:[#allocation0]]
  $region46: #{tpu_custom_call.1} parent=0
    _
  %s8 = ssub.s32 1, %s6
  %s9 = scalar_select 0, %s8, %s6
  $region1: #{tpu_custom_call.1} parent=0
    #allocation2 [shape = 'u8[6144]{0}', space=vmem, size = 0x1800, scoped, tag = 'input window, operand 0, single buffered']
    #allocation3 [shape = 's32[1]{0}', space=sflag, size = 0x4, scoped, tag = 'scoped memory for tpu_custom_call.1']
    #allocation4 [shape = 's32[1]{0}', space=sflag, size = 0x4, scoped, tag = 'scoped memory for tpu_custom_call.1']
    #allocation5 [shape = 'u8[65536]{0}', space=vmem, size = 0x10000, scoped, tag = 'input window, operand 1, single buffered']
    #allocation6 [shape = 's32[1]{0}', space=sflag, size = 0x4, scoped, tag = 'scoped memory for tpu_custom_call.1']
    #allocation7 [shape = 'u8[1024]{0}', space=vmem, size = 0x400, scoped, tag = 'input window, operand 2, single buffered']
    #allocation8 [shape = 'u8[65536]{0}', space=vmem, size = 0x10000, scoped, tag = 'input window, operand 3, single buffered']
    #allocation9 [shape = 's32[1]{0}', space=sflag, size = 0x4, scoped, tag = 'scoped memory for tpu_custom_call.1']
    #allocation10 [shape = 'u8[12288]{0}', space=vmem, size = 0x3000, scoped, tag = 'output window, operand 0, single buffered']
    %10 = vsyncpa [#allocation3], 0
    %11 = vsyncpa [#allocation6], 0
    %12 = vsyncpa [#allocation9], 0
    %13 = vsyncpa [#allocation4], 0
    // Predicated region
    $region2: #{tpu_custom_call.1} parent=1 // pred_check
      _
    $region3: #{tpu_custom_call.1} parent=1 // pred_check_branch
      %15 = sbr.rel (0) target = $region5
    $region4: #{tpu_custom_call.1} parent=1 // pred_region
      %17 = vsyncadd [#allocation3], 0
      %s18 = sshll.u32 %s0, 4
      %s19 = int_to_ptr.hbm [resolvable:$true] %s18
      %s20 = sshll.u32 [#allocation2], 4
      %s21 = int_to_ptr.vmem [resolvable:$true] %s20
      %26 = dma.hbm_to_vmem [thread:$0]  %s19, 192, %s21, [#allocation3], 64, 64, 4
    $region5: #{tpu_custom_call.1} parent=1 // pred_fallthru
      _
    // Predicated region
    $region6: #{tpu_custom_call.1} parent=1 // pred_check
      _
    $region7: #{tpu_custom_call.1} parent=1 // pred_check_branch
      %28 = sbr.rel (0) target = $region9
    $region8: #{tpu_custom_call.1} parent=1 // pred_region
      %30 = vsyncadd [#allocation6], 0
      %s31 = sshll.u32 %s1, 4
      %s32 = int_to_ptr.hbm [resolvable:$true] %s31
      %s33 = sshll.u32 [#allocation5], 4
      %s34 = int_to_ptr.vmem [resolvable:$true] %s33
      %39 = dma.hbm_to_vmem [thread:$0]  %s32, 2048, %s34, [#allocation6], 128, 128, 8
    $region9: #{tpu_custom_call.1} parent=1 // pred_fallthru
      _
    // Predicated region
    $region10: #{tpu_custom_call.1} parent=1 // pred_check
      _
    $region11: #{tpu_custom_call.1} parent=1 // pred_check_branch
      %41 = sbr.rel (0) target = $region13
    $region12: #{tpu_custom_call.1} parent=1 // pred_region
      %43 = vsyncadd [#allocation6], 0
      %s45 = sshll.u32 %s2, 4
      %s46 = int_to_ptr.hbm [resolvable:$true] %s45
      %s47 = sshll.u32 [#allocation7], 4
      %s48 = int_to_ptr.vmem [resolvable:$true] %s47
      %50 = dma.hbm_to_vmem [thread:$0]  %s46, 32, %s48, [#allocation6]
    $region13: #{tpu_custom_call.1} parent=1 // pred_fallthru
      _
    // Predicated region
    $region14: #{tpu_custom_call.1} parent=1 // pred_check
      _
    $region15: #{tpu_custom_call.1} parent=1 // pred_check_branch
      %52 = sbr.rel (0) target = $region17
    $region16: #{tpu_custom_call.1} parent=1 // pred_region
      %54 = vsyncadd [#allocation9], 0
      %s55 = sshll.u32 %s3, 4
      %s56 = int_to_ptr.hbm [resolvable:$true] %s55
      %s57 = sshll.u32 [#allocation8], 4
      %s58 = int_to_ptr.vmem [resolvable:$true] %s57
      %63 = dma.hbm_to_vmem [thread:$0]  %s56, 2048, %s58, [#allocation9], 64, 64, 4
    $region17: #{tpu_custom_call.1} parent=1 // pred_fallthru
      _
    // Predicated region
    $region18: #{tpu_custom_call.1} parent=1 // pred_check
      _
    $region19: #{tpu_custom_call.1} parent=1 // pred_check_branch
      %65 = sbr.rel (0) target = $region21
    $region20: #{tpu_custom_call.1} parent=1 // pred_region
      _
    $region21: #{tpu_custom_call.1} parent=1 // pred_fallthru
      _
    // Predicated region
    $region22: #{tpu_custom_call.1} parent=1 // pred_check
      _
    $region23: #{tpu_custom_call.1} parent=1 // pred_check_branch
      %67 = sbr.rel (0) target = $region25
    $region24: #{tpu_custom_call.1} parent=1 // pred_region
      %69 = dma.done [#allocation3], 192
    $region25: #{tpu_custom_call.1} parent=1 // pred_fallthru
      _
    // Predicated region
    $region26: #{tpu_custom_call.1} parent=1 // pred_check
      _
    $region27: #{tpu_custom_call.1} parent=1 // pred_check_branch
      %71 = sbr.rel (0) target = $region29
    $region28: #{tpu_custom_call.1} parent=1 // pred_region
      %73 = dma.done [#allocation6], 2048
    $region29: #{tpu_custom_call.1} parent=1 // pred_fallthru
      _
    // Predicated region
    $region30: #{tpu_custom_call.1} parent=1 // pred_check
      _
    $region31: #{tpu_custom_call.1} parent=1 // pred_check_branch
      %75 = sbr.rel (0) target = $region33
    $region32: #{tpu_custom_call.1} parent=1 // pred_region
      %77 = dma.done [#allocation6], 32
    $region33: #{tpu_custom_call.1} parent=1 // pred_fallthru
      _
    // Predicated region
    $region34: #{tpu_custom_call.1} parent=1 // pred_check
      _
    $region35: #{tpu_custom_call.1} parent=1 // pred_check_branch
      %79 = sbr.rel (0) target = $region37
    $region36: #{tpu_custom_call.1} parent=1 // pred_region
      %81 = dma.done [#allocation9], 2048
    $region37: #{tpu_custom_call.1} parent=1 // pred_fallthru
      _
    %v82 = vld [vmem:[#allocation2] sm:$0xf]
    %v83 = vld [vmem:[#allocation2 + $0x4] sm:$0xf]
    %v84 = vld [vmem:[#allocation2 + $0x8] sm:$0xf]
    %v85 = vld [vmem:[#allocation5] sm:$0xff]
    %v86 = vld [vmem:[#allocation5 + $0x8] sm:$0xff]
    %v87 = vld [vmem:[#allocation5 + $0x10] sm:$0xff]
    %v88 = vld [vmem:[#allocation5 + $0x18] sm:$0xff]
    %v89 = vld [vmem:[#allocation5 + $0x20] sm:$0xff]
    %v90 = vld [vmem:[#allocation5 + $0x28] sm:$0xff]
    %v91 = vld [vmem:[#allocation5 + $0x30] sm:$0xff]
    %v92 = vld [vmem:[#allocation5 + $0x38] sm:$0xff]
    %v93 = vld [vmem:[#allocation5 + $0x40] sm:$0xff]
    %v94 = vld [vmem:[#allocation5 + $0x48] sm:$0xff]
    %v95 = vld [vmem:[#allocation5 + $0x50] sm:$0xff]
    %v96 = vld [vmem:[#allocation5 + $0x58] sm:$0xff]
    %v97 = vld [vmem:[#allocation5 + $0x60] sm:$0xff]
    %v98 = vld [vmem:[#allocation5 + $0x68] sm:$0xff]
    %v99 = vld [vmem:[#allocation5 + $0x70] sm:$0xff]
    %v100 = vld [vmem:[#allocation5 + $0x78] sm:$0xff]
    %v101 = vld [vmem:[#allocation7] sm:$0x3]
    %v103 = vperm.slane %v101, 0
    %v104 = vperm.slane %v101, 1
    %v110 = vunpack.c.l.b16 %v82
    %v111 = vunpack.c.l.b16 %v83
    %v112 = vunpack.c.l.b16 %v84
    %v113 = vpack.c.b16 %v111, %v110
    %v114 = vpack.c.b16 %v112, %v112
    %v133 = vunpack.c.l.b16 %v85
    %v134 = vunpack.c.h.b16 %v85
    %v135 = vunpack.c.l.b16 %v86
    %v136 = vunpack.c.h.b16 %v86
    %v137 = vunpack.c.l.b16 %v87
    %v138 = vunpack.c.h.b16 %v87
    %v139 = vunpack.c.l.b16 %v88
    %v140 = vunpack.c.h.b16 %v88
    %v141 = vunpack.c.l.b16 %v89
    %v142 = vunpack.c.h.b16 %v89
    %v143 = vunpack.c.l.b16 %v90
    %v144 = vunpack.c.h.b16 %v90
    %v145 = vunpack.c.l.b16 %v91
    %v146 = vunpack.c.h.b16 %v91
    %v147 = vunpack.c.l.b16 %v92
    %v148 = vunpack.c.h.b16 %v92
    %v149 = vunpack.c.l.b16 %v93
    %v150 = vunpack.c.h.b16 %v93
    %v151 = vunpack.c.l.b16 %v94
    %v152 = vunpack.c.h.b16 %v94
    %v153 = vunpack.c.l.b16 %v95
    %v154 = vunpack.c.h.b16 %v95
    %v155 = vunpack.c.l.b16 %v96
    %v156 = vunpack.c.h.b16 %v96
    %v157 = vunpack.c.l.b16 %v97
    %v158 = vunpack.c.h.b16 %v97
    %v159 = vunpack.c.l.b16 %v98
    %v160 = vunpack.c.h.b16 %v98
    %v161 = vunpack.c.l.b16 %v99
    %v162 = vunpack.c.h.b16 %v99
    %v163 = vunpack.c.l.b16 %v100
    %v164 = vunpack.c.h.b16 %v100
    %v165 = vpack.c.b16 %v135, %v133
    %v166 = vpack.c.b16 %v136, %v134
    %v167 = vpack.c.b16 %v139, %v137
    %v168 = vpack.c.b16 %v140, %v138
    %v169 = vpack.c.b16 %v143, %v141
    %v170 = vpack.c.b16 %v144, %v142
    %v171 = vpack.c.b16 %v147, %v145
    %v172 = vpack.c.b16 %v148, %v146
    %v173 = vpack.c.b16 %v151, %v149
    %v174 = vpack.c.b16 %v152, %v150
    %v175 = vpack.c.b16 %v155, %v153
    %v176 = vpack.c.b16 %v156, %v154
    %v177 = vpack.c.b16 %v159, %v157
    %v178 = vpack.c.b16 %v160, %v158
    %v179 = vpack.c.b16 %v163, %v161
    %v180 = vpack.c.b16 %v164, %v162
    %197 = vmatpush.bf16.msra.mxu0 %v179
    %198 = vmatpush.bf16.msra.mxu0 %v177
    %199 = vmatpush.bf16.msra.mxu0 %v175
    %200 = vmatpush.bf16.msra.mxu0 %v173
    %201 = vmatpush.bf16.msra.mxu0 %v171
    %202 = vmatpush.bf16.msra.mxu0 %v169
    %203 = vmatpush.bf16.msra.mxu0 %v167
    %204 = vmatpush.bf16.msra.mxu0 %v165
    %205 = vmatmul.bf16.gmra.mxu0 %v113
    %v206 = vpop.f32.mrf.mxu0
    %v207 = vadd.f32 %v103, %v206
    %v208 = vpop.f32.mrf.mxu0
    %v209 = vadd.f32 %v103, %v208
    %210 = vmatmul.bf16.gmra.mxu0 %v114
    %v211 = vpop.f32.mrf.mxu0
    %v212 = vadd.f32 %v103, %v211
    %v213 = vpop.f32.mrf.mxu0
    %214 = vdwg.mxu0
    %215 = vmatpush.bf16.msra.mxu0 %v180
    %216 = vmatpush.bf16.msra.mxu0 %v178
    %217 = vmatpush.bf16.msra.mxu0 %v176
    %218 = vmatpush.bf16.msra.mxu0 %v174
    %219 = vmatpush.bf16.msra.mxu0 %v172
    %220 = vmatpush.bf16.msra.mxu0 %v170
    %221 = vmatpush.bf16.msra.mxu0 %v168
    %222 = vmatpush.bf16.msra.mxu0 %v166
    %223 = vmatmul.bf16.gmra.mxu0 %v113
    %v224 = vpop.f32.mrf.mxu0
    %v225 = vadd.f32 %v104, %v224
    %v226 = vpop.f32.mrf.mxu0
    %v227 = vadd.f32 %v104, %v226
    %228 = vmatmul.bf16.gmra.mxu0 %v114
    %v229 = vpop.f32.mrf.mxu0
    %v230 = vadd.f32 %v104, %v229
    %v231 = vpop.f32.mrf.mxu0
    %232 = vdwg.mxu0
    %v233 = vmax.f32 %v207, 0.0
    %v234 = vmax.f32 %v225, 0.0
    %v235 = vmax.f32 %v209, 0.0
    %v236 = vmax.f32 %v227, 0.0
    %v237 = vmax.f32 %v212, 0.0
    %v238 = vmax.f32 %v230, 0.0
    %v239 = vpack.c.bf16 %v235, %v233
    %v240 = vpack.c.bf16 %v236, %v234
    %v241 = vpack.c.bf16 %v237, %v237
    %v242 = vpack.c.bf16 %v238, %v238
    %v243 = vld [vmem:[#allocation8] sm:$0xf]
    %v244 = vld [vmem:[#allocation8 + $0x4] sm:$0xf]
    %v245 = vld [vmem:[#allocation8 + $0x8] sm:$0xf]
    %v246 = vld [vmem:[#allocation8 + $0xc] sm:$0xf]
    %v247 = vld [vmem:[#allocation8 + $0x10] sm:$0xf]
    %v248 = vld [vmem:[#allocation8 + $0x14] sm:$0xf]
    %v249 = vld [vmem:[#allocation8 + $0x18] sm:$0xf]
    %v250 = vld [vmem:[#allocation8 + $0x1c] sm:$0xf]
    %v251 = vld [vmem:[#allocation8 + $0x20] sm:$0xf]
    %v252 = vld [vmem:[#allocation8 + $0x24] sm:$0xf]
    %v253 = vld [vmem:[#allocation8 + $0x28] sm:$0xf]
    %v254 = vld [vmem:[#allocation8 + $0x2c] sm:$0xf]
    %v255 = vld [vmem:[#allocation8 + $0x30] sm:$0xf]
    %v256 = vld [vmem:[#allocation8 + $0x34] sm:$0xf]
    %v257 = vld [vmem:[#allocation8 + $0x38] sm:$0xf]
    %v258 = vld [vmem:[#allocation8 + $0x3c] sm:$0xf]
    %v259 = vld [vmem:[#allocation8 + $0x40] sm:$0xf]
    %v260 = vld [vmem:[#allocation8 + $0x44] sm:$0xf]
    %v261 = vld [vmem:[#allocation8 + $0x48] sm:$0xf]
    %v262 = vld [vmem:[#allocation8 + $0x4c] sm:$0xf]
    %v263 = vld [vmem:[#allocation8 + $0x50] sm:$0xf]
    %v264 = vld [vmem:[#allocation8 + $0x54] sm:$0xf]
    %v265 = vld [vmem:[#allocation8 + $0x58] sm:$0xf]
    %v266 = vld [vmem:[#allocation8 + $0x5c] sm:$0xf]
    %v267 = vld [vmem:[#allocation8 + $0x60] sm:$0xf]
    %v268 = vld [vmem:[#allocation8 + $0x64] sm:$0xf]
    %v269 = vld [vmem:[#allocation8 + $0x68] sm:$0xf]
    %v270 = vld [vmem:[#allocation8 + $0x6c] sm:$0xf]
    %v271 = vld [vmem:[#allocation8 + $0x70] sm:$0xf]
    %v272 = vld [vmem:[#allocation8 + $0x74] sm:$0xf]
    %v273 = vld [vmem:[#allocation8 + $0x78] sm:$0xf]
    %v274 = vld [vmem:[#allocation8 + $0x7c] sm:$0xf]
    %v275 = vld [vmem:[%s4] sm:$0x1]
    %v277 = vperm.slane %v275, 0
    %v311 = vunpack.c.l.b16 %v243
    %v312 = vunpack.c.l.b16 %v244
    %v313 = vunpack.c.l.b16 %v245
    %v314 = vunpack.c.l.b16 %v246
    %v315 = vunpack.c.l.b16 %v247
    %v316 = vunpack.c.l.b16 %v248
    %v317 = vunpack.c.l.b16 %v249
    %v318 = vunpack.c.l.b16 %v250
    %v319 = vunpack.c.l.b16 %v251
    %v320 = vunpack.c.l.b16 %v252
    %v321 = vunpack.c.l.b16 %v253
    %v322 = vunpack.c.l.b16 %v254
    %v323 = vunpack.c.l.b16 %v255
    %v324 = vunpack.c.l.b16 %v256
    %v325 = vunpack.c.l.b16 %v257
    %v326 = vunpack.c.l.b16 %v258
    %v327 = vunpack.c.l.b16 %v259
    %v328 = vunpack.c.l.b16 %v260
    %v329 = vunpack.c.l.b16 %v261
    %v330 = vunpack.c.l.b16 %v262
    %v331 = vunpack.c.l.b16 %v263
    %v332 = vunpack.c.l.b16 %v264
    %v333 = vunpack.c.l.b16 %v265
    %v334 = vunpack.c.l.b16 %v266
    %v335 = vunpack.c.l.b16 %v267
    %v336 = vunpack.c.l.b16 %v268
    %v337 = vunpack.c.l.b16 %v269
    %v338 = vunpack.c.l.b16 %v270
    %v339 = vunpack.c.l.b16 %v271
    %v340 = vunpack.c.l.b16 %v272
    %v341 = vunpack.c.l.b16 %v273
    %v342 = vunpack.c.l.b16 %v274
    %v343 = vpack.c.b16 %v312, %v311
    %v344 = vpack.c.b16 %v314, %v313
    %v345 = vpack.c.b16 %v316, %v315
    %v346 = vpack.c.b16 %v318, %v317
    %v347 = vpack.c.b16 %v320, %v319
    %v348 = vpack.c.b16 %v322, %v321
    %v349 = vpack.c.b16 %v324, %v323
    %v350 = vpack.c.b16 %v326, %v325
    %v351 = vpack.c.b16 %v328, %v327
    %v352 = vpack.c.b16 %v330, %v329
    %v353 = vpack.c.b16 %v332, %v331
    %v354 = vpack.c.b16 %v334, %v333
    %v355 = vpack.c.b16 %v336, %v335
    %v356 = vpack.c.b16 %v338, %v337
    %v357 = vpack.c.b16 %v340, %v339
    %v358 = vpack.c.b16 %v342, %v341
    %375 = vmatpush.bf16.msra.mxu0 %v350
    %376 = vmatpush.bf16.msra.mxu0 %v349
    %377 = vmatpush.bf16.msra.mxu0 %v348
    %378 = vmatpush.bf16.msra.mxu0 %v347
    %379 = vmatpush.bf16.msra.mxu0 %v346
    %380 = vmatpush.bf16.msra.mxu0 %v345
    %381 = vmatpush.bf16.msra.mxu0 %v344
    %382 = vmatpush.bf16.msra.mxu0 %v343
    %383 = vmatmul.bf16.gmra.mxu0 %v239
    %v384 = vpop.f32.mrf.mxu0
    %v385 = vadd.f32 %v277, %v384
    %v386 = vpop.f32.mrf.mxu0
    %v387 = vadd.f32 %v277, %v386
    %388 = vmatmul.bf16.gmra.mxu0 %v241
    %v389 = vpop.f32.mrf.mxu0
    %v390 = vadd.f32 %v277, %v389
    %v391 = vpop.f32.mrf.mxu0
    %392 = vdwg.mxu0
    %393 = vmatpush.bf16.msra.mxu0 %v358
    %394 = vmatpush.bf16.msra.mxu0 %v357
    %395 = vmatpush.bf16.msra.mxu0 %v356
    %396 = vmatpush.bf16.msra.mxu0 %v355
    %397 = vmatpush.bf16.msra.mxu0 %v354
    %398 = vmatpush.bf16.msra.mxu0 %v353
    %399 = vmatpush.bf16.msra.mxu0 %v352
    %400 = vmatpush.bf16.msra.mxu0 %v351
    %401 = vmatmul.bf16.gmra.mxu0 %v240
    %v402 = vpop.f32.mrf.mxu0
    %v403 = vadd.f32 %v385, %v402
    %v404 = vpop.f32.mrf.mxu0
    %v405 = vadd.f32 %v387, %v404
    %406 = vmatmul.bf16.gmra.mxu0 %v242
    %v407 = vpop.f32.mrf.mxu0
    %v408 = vadd.f32 %v390, %v407
    %v409 = vpop.f32.mrf.mxu0
    %410 = vdwg.mxu0
    %411 = vst [vmem:[#allocation10] sm:$0xff] %v403
    %412 = vst [vmem:[#allocation10 + $0x8] sm:$0xff] %v405
    %413 = vst [vmem:[#allocation10 + $0x10] sm:$0xff] %v408
    // Predicated region
    $region38: #{tpu_custom_call.1} parent=1 // pred_check
      _
    $region39: #{tpu_custom_call.1} parent=1 // pred_check_branch
      %415 = sbr.rel (0) target = $region41
    $region40: #{tpu_custom_call.1} parent=1 // pred_region
      %417 = vsyncadd [#allocation4], 0
      %s418 = sshll.u32 [#allocation10], 4
      %s419 = int_to_ptr.vmem [resolvable:$true] %s418
      %s420 = sshll.u32 %s5, 4
      %s421 = int_to_ptr.hbm [resolvable:$true] %s420
      %426 = dma.vmem_to_hbm [thread:$0]  %s419, 384, %s421, [#allocation4], 128, 128, 8
    $region41: #{tpu_custom_call.1} parent=1 // pred_fallthru
      _
    // Predicated region
    $region42: #{tpu_custom_call.1} parent=1 // pred_check
      _
    $region43: #{tpu_custom_call.1} parent=1 // pred_check_branch
      %428 = sbr.rel (0) target = $region45
    $region44: #{tpu_custom_call.1} parent=1 // pred_region
      %430 = dma.done [#allocation4], 384
    $region45: #{tpu_custom_call.1} parent=1 // pred_fallthru
      _
    %431 = vsyncpa [#allocation3], 1
    %432 = vsyncpa [#allocation6], 1
    %433 = vsyncpa [#allocation9], 1
    %434 = vsyncpa [#allocation4], 1

</llo_original>
